<compile_context>
chip_gen: v6e
topology: v6e:2x2x1
jax: 0.10.0
libtpu: 0.0.40
codegen_flags: <defaults>
</compile_context>

<pallas_src>
import jax
import jax.numpy as jnp
from jax.experimental import pallas as pl
from jax.experimental.pallas import tpu as pltpu


def _round_up(a, b):
    return (a + b - 1) // b * b


def _decoder_kernel(x_ref, w1_ref, m2_ref, b2_ref, m3_ref, b3_ref, u_ref, o_ref):
    """One batch tile per grid step.

    x_ref : (TILE_N, L)       bf16 latent rows
    w1_ref: (L, K*T4)         bf16 Linear weight (transposed)
    m2_ref: (K*T4, K*C*T4)    bf16 convT2 weight x BN2 scale, delta over t4
    b2_ref: (1, K*C*T4)       f32  folded BN2 shift
    m3_ref: (K*C*T4, C*T4)    bf16 convT3 weight x BN3 scale, delta over (c,t4)
    b3_ref: (1, C*T4)         f32  folded BN3 shift
    u_ref : (C*T4, C*T)       bf16 0/1 nearest-neighbour x4 upsample matrix
    o_ref : (TILE_N, C*T)     f32  flattened output slab (c major, t minor)
    """
    bf16 = jnp.bfloat16

    # 1) Linear + ReLU (MXU): (TILE_N, L) @ (L, K*T4)
    h1 = jnp.dot(x_ref[...], w1_ref[...], preferred_element_type=jnp.float32)
    h1 = jnp.maximum(h1, 0.0)

    # 2) reshape(K,T4) + ConvTranspose2d(K,K,(C,1)) + folded BN2 + ReLU (MXU+VPU).
    h2 = jnp.dot(h1.astype(bf16), m2_ref[...], preferred_element_type=jnp.float32)
    h2 = jnp.maximum(h2 + b2_ref[...], 0.0)

    # 3) ConvTranspose2d(K,1,(1,1)) + folded BN3 + ReLU, still at T/4 resolution.
    h3 = jnp.dot(h2.astype(bf16), m3_ref[...], preferred_element_type=jnp.float32)
    h3 = jnp.maximum(h3 + b3_ref[...], 0.0)

    # 4) Nearest-neighbour x4 upsample as a 0/1 selection matmul (commutes with
    #    the preceding ReLU since every output column selects a single element).
    y = jnp.dot(h3.astype(bf16), u_ref[...], preferred_element_type=jnp.float32)
    o_ref[...] = y.astype(o_ref.dtype)


def vanilla_decoder_forward(x, params, *, C, T, eps=1e-5, tile_n=256):
    """Pallas forward pass of VanillaDecoder (inference-mode BatchNorm).

    x: (N, latent_dim) float32.  Returns (N, 1, C, T) float32.
    """
    w1 = params["linear_w"]            # (K*T4, L)    torch nn.Linear weight
    w2 = params["convt2_w"]            # (K, K, C, 1) torch ConvTranspose2d weight
    w3 = params["convt3_w"]            # (K, 1, 1, 1)
    g2, be2, m2, v2 = params["bn2"]    # each (K,)
    g3, be3, m3, v3 = params["bn3"]    # each (1,)

    N, L = x.shape
    K = w2.shape[0]
    assert T % 4 == 0, "T must be divisible by 4"
    T4 = T // 4
    F1 = K * T4            # linear features, column = ic*T4 + t4
    F2 = K * C * T4        # stage-2 features, column = (oc*C + c)*T4 + t4
    F3 = C * T4            # stage-3 features, column = c*T4 + t4
    FO = C * T             # output features, column = c*T + t
    assert w1.shape == (F1, L)

    f32, bf16 = jnp.float32, jnp.bfloat16

    # ---- wrapper-side parameter folding (pure JAX, parameter-only) ----------
    w1m = jnp.asarray(w1, f32).T.astype(bf16)                        # (L, F1)

    s2 = (jnp.asarray(g2, f32) / jnp.sqrt(jnp.asarray(v2, f32) + eps))     # (K,)
    shift2 = jnp.asarray(be2, f32) - jnp.asarray(m2, f32) * s2             # (K,)
    w2s = jnp.asarray(w2[..., 0], f32) * s2[None, :, None]           # [ic, oc, c]
    eye_t4 = jnp.eye(T4, dtype=f32)
    # M2[ic*T4+t4, (oc*C+c)*T4+t4'] = w2s[ic,oc,c] * (t4 == t4')
    m2m = jnp.einsum("ioc,tu->itocu", w2s, eye_t4).reshape(F1, F2).astype(bf16)
    b2row = jnp.repeat(shift2, C * T4)[None, :].astype(f32)          # (1, F2)

    s3 = jnp.asarray(g3, f32)[0] / jnp.sqrt(jnp.asarray(v3, f32)[0] + eps)
    shift3 = jnp.asarray(be3, f32)[0] - jnp.asarray(m3, f32)[0] * s3
    w3s = jnp.asarray(w3[:, 0, 0, 0], f32) * s3                      # (K,)  [oc]
    eye_ct4 = jnp.eye(C * T4, dtype=f32)
    # M3[(oc*C+c)*T4+t4, c'*T4+t4'] = w3s[oc] * delta((c,t4),(c',t4'))
    m3m = (w3s[:, None, None] * eye_ct4[None, :, :]).reshape(F2, F3).astype(bf16)
    b3row = jnp.full((1, F3), shift3, f32)

    # U[c*T4+t4, c'*T+t] = (c == c') * (t // 4 == t4)   (0/1, exact in bf16)
    up_t = (jnp.arange(T)[None, :] // 4 == jnp.arange(T4)[:, None]).astype(f32)
    eye_c = jnp.eye(C, dtype=f32)
    um = jnp.einsum("cd,tu->ctdu", eye_c, up_t).reshape(F3, FO).astype(bf16)

    # ---- batch tiling --------------------------------------------------------
    tile_n = int(min(tile_n, _round_up(max(N, 1), 16)))
    tile_n = _round_up(tile_n, 16)                 # bf16 sublane-friendly tiles
    n_pad = _round_up(N, tile_n)
    x_f = jnp.asarray(x, f32)
    if n_pad != N:
        x_f = jnp.pad(x_f, ((0, n_pad - N), (0, 0)))
    x_bf = x_f.astype(bf16)
    grid = (n_pad // tile_n,)

    # ---- cost estimate + VMEM budget ----------------------------------------
    flops = 2 * n_pad * (L * F1 + F1 * F2 + F2 * F3 + F3 * FO)
    weight_bytes = 2 * (L * F1 + F1 * F2 + F2 * F3 + F3 * FO) + 4 * (F2 + F3)
    io_bytes = n_pad * (L * 2 + FO * 4)
    cost = pl.CostEstimate(flops=flops, transcendentals=0,
                           bytes_accessed=weight_bytes + io_bytes)

    block_bytes = tile_n * (L * 2 + FO * 4)
    interm_bytes = 4 * tile_n * (F1 + F2 + F3 + FO)
    vmem_needed = 2 * (weight_bytes + block_bytes) + interm_bytes
    vmem_limit = int(min(64 * 2**20, max(32 * 2**20, vmem_needed + 8 * 2**20)))

    out = pl.pallas_call(
        _decoder_kernel,
        out_shape=jax.ShapeDtypeStruct((n_pad, FO), f32),
        grid=grid,
        in_specs=[
            pl.BlockSpec((tile_n, L), lambda i: (i, 0)),      # x (per batch tile)
            pl.BlockSpec((L, F1), lambda i: (0, 0)),          # w1m    (resident)
            pl.BlockSpec((F1, F2), lambda i: (0, 0)),         # m2m
            pl.BlockSpec((1, F2), lambda i: (0, 0)),          # b2row
            pl.BlockSpec((F2, F3), lambda i: (0, 0)),         # m3m
            pl.BlockSpec((1, F3), lambda i: (0, 0)),          # b3row
            pl.BlockSpec((F3, FO), lambda i: (0, 0)),         # upsample matrix
        ],
        out_specs=pl.BlockSpec((tile_n, FO), lambda i: (i, 0)),
        compiler_params=pltpu.CompilerParams(
            dimension_semantics=("parallel",),   # batch tiles -> dual TC on v7x
            vmem_limit_bytes=vmem_limit,
        ),
        cost_estimate=cost,
    )(x_bf, w1m, m2m, b2row, m3m, b3row, um)

    return out[:N].reshape(N, 1, C, T)


def _vanilla_decoder_reference(x, params, *, C, T, eps=1e-5):
    """Pure-JAX mirror of the PyTorch forward (inference-mode BatchNorm)."""
    w1 = params["linear_w"]
    w2 = params["convt2_w"]
    w3 = params["convt3_w"]
    g2, be2, m2, v2 = params["bn2"]
    g3, be3, m3, v3 = params["bn3"]
    N = x.shape[0]
    K = w2.shape[0]
    T4 = T // 4
    hp = jax.lax.Precision.HIGHEST

    h = jnp.maximum(jnp.dot(x, w1.T, precision=hp), 0.0)            # Linear+ReLU
    h = h.reshape(N, K, 1, T4)
    h = jnp.repeat(h, 4, axis=-1)                                   # nearest x4
    # ConvTranspose2d(K, K, (C, 1)): out[n,oc,c,t] = sum_ic in[n,ic,0,t]*w2[ic,oc,c,0]
    h2 = jnp.einsum("nit,ioc->noct", h[:, :, 0, :], w2[..., 0], precision=hp)
    h2 = (h2 - m2[None, :, None, None]) / jnp.sqrt(v2 + eps)[None, :, None, None]
    h2 = h2 * g2[None, :, None, None] + be2[None, :, None, None]
    h2 = jnp.maximum(h2, 0.0)
    # ConvTranspose2d(K, 1, (1, 1))
    h3 = jnp.einsum("noct,o->nct", h2, w3[:, 0, 0, 0], precision=hp)[:, None]
    h3 = (h3 - m3[None, :, None, None]) / jnp.sqrt(v3 + eps)[None, :, None, None]
    h3 = h3 * g3[None, :, None, None] + be3[None, :, None, None]
    return jnp.maximum(h3, 0.0)


if __name__ == "__main__":
    # Small shapes consistent with the module: C=4, T=16, latent_dim=32,
    # num_kernels=5, batch of 2.
    C, T, latent_dim, K = 4, 16, 32, 5
    N = 2
    T4 = T // 4

    key = jax.random.PRNGKey(0)
    ks = jax.random.split(key, 8)
    params = {
        "linear_w": 0.2 * jax.random.normal(ks[0], (K * T4, latent_dim), jnp.float32),
        "convt2_w": 0.2 * jax.random.normal(ks[1], (K, K, C, 1), jnp.float32),
        "convt3_w": 0.2 * jax.random.normal(ks[2], (K, 1, 1, 1), jnp.float32),
        "bn2": (
            1.0 + 0.1 * jax.random.normal(ks[3], (K,), jnp.float32),   # gamma
            0.1 * jax.random.normal(ks[4], (K,), jnp.float32),         # beta
            0.1 * jax.random.normal(ks[5], (K,), jnp.float32),         # running mean
            0.5 + jax.random.uniform(ks[6], (K,), jnp.float32),        # running var
        ),
        "bn3": (
            jnp.array([1.1], jnp.float32),
            jnp.array([0.05], jnp.float32),
            jnp.array([0.02], jnp.float32),
            jnp.array([0.8], jnp.float32),
        ),
    }
    x = jax.random.normal(ks[7], (N, latent_dim), jnp.float32)

    y = vanilla_decoder_forward(x, params, C=C, T=T)
    y = jax.block_until_ready(y)

    y_ref = _vanilla_decoder_reference(x, params, C=C, T=T)

    assert y.shape == (N, 1, C, T), y.shape
    assert y.dtype == jnp.float32
    # bf16 matmul inputs with f32 accumulation -> relative error well under 2e-2.
    assert bool(jnp.allclose(y, y_ref, rtol=2e-2, atol=1e-2)), (
        "max abs err = %f" % float(jnp.max(jnp.abs(y - y_ref))))
    print("KERNEL_OK")
</pallas_src>

<mosaic_0001>
module attributes {stable_mosaic.version = 11 : i64} {
  func.func @_decoder_kernel(%arg0: i32, %arg1: memref<16x32xbf16, #tpu.memory_space<vmem>>, %arg2: memref<32x20xbf16, #tpu.memory_space<vmem>>, %arg3: memref<20x80xbf16, #tpu.memory_space<vmem>>, %arg4: memref<1x80xf32, #tpu.memory_space<vmem>>, %arg5: memref<80x16xbf16, #tpu.memory_space<vmem>>, %arg6: memref<1x16xf32, #tpu.memory_space<vmem>>, %arg7: memref<16x64xbf16, #tpu.memory_space<vmem>>, %arg8: memref<16x64xf32, #tpu.memory_space<vmem>>) attributes {dimension_semantics = [#tpu.dimension_semantics<parallel>], iteration_bounds = array<i64: 1>, scalar_prefetch = 0 : i64, scratch_operands = 0 : i64, tpu.core_type = #tpu.core_type<tc>, window_params = [{transform_indices = @transform_0, window_bounds = array<i64: 16, 32>}, {pipeline_mode = #tpu.pipeline_mode<synchronous>, transform_indices = @transform_1, window_bounds = array<i64: 32, 20>}, {pipeline_mode = #tpu.pipeline_mode<synchronous>, transform_indices = @transform_2, window_bounds = array<i64: 20, 80>}, {pipeline_mode = #tpu.pipeline_mode<synchronous>, transform_indices = @transform_3, window_bounds = array<i64: 1, 80>}, {pipeline_mode = #tpu.pipeline_mode<synchronous>, transform_indices = @transform_4, window_bounds = array<i64: 80, 16>}, {pipeline_mode = #tpu.pipeline_mode<synchronous>, transform_indices = @transform_5, window_bounds = array<i64: 1, 16>}, {pipeline_mode = #tpu.pipeline_mode<synchronous>, transform_indices = @transform_6, window_bounds = array<i64: 16, 64>}, {transform_indices = @transform_7, window_bounds = array<i64: 16, 64>}]} {
    %c0 = arith.constant 0 : index
    %c0_0 = arith.constant 0 : index
    %0 = vector.load %arg1[%c0, %c0_0] : memref<16x32xbf16, #tpu.memory_space<vmem>>, vector<16x32xbf16>
    %c0_1 = arith.constant 0 : index
    %c0_2 = arith.constant 0 : index
    %1 = vector.load %arg2[%c0_1, %c0_2] : memref<32x20xbf16, #tpu.memory_space<vmem>>, vector<32x20xbf16>
    %cst = arith.constant dense<0.000000e+00> : vector<16x20xf32>
    %2 = tpu.matmul %0, %1, %cst {dimension_numbers = #tpu.dot_dimension_numbers<[1], [0], [0], [1], [0, 0, 1, 1], [], []>} : vector<16x32xbf16>, vector<32x20xbf16>, vector<16x20xf32> -> vector<16x20xf32>
    %cst_3 = arith.constant 0.000000e+00 : f32
    %3 = vector.broadcast %cst_3 : f32 to vector<16x20xf32>
    %4 = arith.maximumf %2, %3 : vector<16x20xf32>
    %5 = arith.truncf %4 : vector<16x20xf32> to vector<16x20xbf16>
    %c0_4 = arith.constant 0 : index
    %c0_5 = arith.constant 0 : index
    %6 = vector.load %arg3[%c0_4, %c0_5] : memref<20x80xbf16, #tpu.memory_space<vmem>>, vector<20x80xbf16>
    %cst_6 = arith.constant dense<0.000000e+00> : vector<16x80xf32>
    %7 = tpu.matmul %5, %6, %cst_6 {dimension_numbers = #tpu.dot_dimension_numbers<[1], [0], [0], [1], [0, 0, 1, 1], [], []>} : vector<16x20xbf16>, vector<20x80xbf16>, vector<16x80xf32> -> vector<16x80xf32>
    %c0_7 = arith.constant 0 : index
    %c0_8 = arith.constant 0 : index
    %8 = vector.load %arg4[%c0_7, %c0_8] : memref<1x80xf32, #tpu.memory_space<vmem>>, vector<1x80xf32>
    %9 = vector.broadcast %8 : vector<1x80xf32> to vector<16x80xf32>
    %10 = arith.addf %7, %9 : vector<16x80xf32>
    %cst_9 = arith.constant 0.000000e+00 : f32
    %11 = vector.broadcast %cst_9 : f32 to vector<16x80xf32>
    %12 = arith.maximumf %10, %11 : vector<16x80xf32>
    %13 = arith.truncf %12 : vector<16x80xf32> to vector<16x80xbf16>
    %c0_10 = arith.constant 0 : index
    %c0_11 = arith.constant 0 : index
    %14 = vector.load %arg5[%c0_10, %c0_11] : memref<80x16xbf16, #tpu.memory_space<vmem>>, vector<80x16xbf16>
    %cst_12 = arith.constant dense<0.000000e+00> : vector<16x16xf32>
    %15 = tpu.matmul %13, %14, %cst_12 {dimension_numbers = #tpu.dot_dimension_numbers<[1], [0], [0], [1], [0, 0, 1, 1], [], []>} : vector<16x80xbf16>, vector<80x16xbf16>, vector<16x16xf32> -> vector<16x16xf32>
    %c0_13 = arith.constant 0 : index
    %c0_14 = arith.constant 0 : index
    %16 = vector.load %arg6[%c0_13, %c0_14] : memref<1x16xf32, #tpu.memory_space<vmem>>, vector<1x16xf32>
    %17 = vector.broadcast %16 : vector<1x16xf32> to vector<16x16xf32>
    %18 = arith.addf %15, %17 : vector<16x16xf32>
    %cst_15 = arith.constant 0.000000e+00 : f32
    %19 = vector.broadcast %cst_15 : f32 to vector<16x16xf32>
    %20 = arith.maximumf %18, %19 : vector<16x16xf32>
    %21 = arith.truncf %20 : vector<16x16xf32> to vector<16x16xbf16>
    %c0_16 = arith.constant 0 : index
    %c0_17 = arith.constant 0 : index
    %22 = vector.load %arg7[%c0_16, %c0_17] : memref<16x64xbf16, #tpu.memory_space<vmem>>, vector<16x64xbf16>
    %cst_18 = arith.constant dense<0.000000e+00> : vector<16x64xf32>
    %23 = tpu.matmul %21, %22, %cst_18 {dimension_numbers = #tpu.dot_dimension_numbers<[1], [0], [0], [1], [0, 0, 1, 1], [], []>} : vector<16x16xbf16>, vector<16x64xbf16>, vector<16x64xf32> -> vector<16x64xf32>
    %c0_19 = arith.constant 0 : index
    %c0_20 = arith.constant 0 : index
    %24 = vector.load %arg8[%c0_19, %c0_20] : memref<16x64xf32, #tpu.memory_space<vmem>>, vector<16x64xf32>
    tpu.vector_store %arg8[%c0_19, %c0_20], %23 {strides = array<i32>} : memref<16x64xf32, #tpu.memory_space<vmem>>, vector<16x64xf32>,
    return
  }
  func.func @transform_0(%arg0: i32) -> (i32, i32) {
    %c0_i32 = arith.constant 0 : i32
    %c0_i32_0 = arith.constant 0 : i32
    return %arg0, %c0_i32 : i32, i32
  }
  func.func @transform_1(%arg0: i32) -> (i32, i32) {
    %c0_i32 = arith.constant 0 : i32
    %c0_i32_0 = arith.constant 0 : i32
    %c0_i32_1 = arith.constant 0 : i32
    return %c0_i32, %c0_i32_0 : i32, i32
  }
  func.func @transform_2(%arg0: i32) -> (i32, i32) {
    %c0_i32 = arith.constant 0 : i32
    %c0_i32_0 = arith.constant 0 : i32
    %c0_i32_1 = arith.constant 0 : i32
    return %c0_i32, %c0_i32_0 : i32, i32
  }
  func.func @transform_3(%arg0: i32) -> (i32, i32) {
    %c0_i32 = arith.constant 0 : i32
    %c0_i32_0 = arith.constant 0 : i32
    %c0_i32_1 = arith.constant 0 : i32
    return %c0_i32, %c0_i32_0 : i32, i32
  }
  func.func @transform_4(%arg0: i32) -> (i32, i32) {
    %c0_i32 = arith.constant 0 : i32
    %c0_i32_0 = arith.constant 0 : i32
    %c0_i32_1 = arith.constant 0 : i32
    return %c0_i32, %c0_i32_0 : i32, i32
  }
  func.func @transform_5(%arg0: i32) -> (i32, i32) {
    %c0_i32 = arith.constant 0 : i32
    %c0_i32_0 = arith.constant 0 : i32
    %c0_i32_1 = arith.constant 0 : i32
    return %c0_i32, %c0_i32_0 : i32, i32
  }
  func.func @transform_6(%arg0: i32) -> (i32, i32) {
    %c0_i32 = arith.constant 0 : i32
    %c0_i32_0 = arith.constant 0 : i32
    %c0_i32_1 = arith.constant 0 : i32
    return %c0_i32, %c0_i32_0 : i32, i32
  }
  func.func @transform_7(%arg0: i32) -> (i32, i32) {
    %c0_i32 = arith.constant 0 : i32
    %c0_i32_0 = arith.constant 0 : i32
    return %arg0, %c0_i32 : i32, i32
  }
}

</mosaic_0001>

<llo_original>
// kernel: tpu_custom_call.1
$region0: #{tpu_custom_call.1}
  #allocation0 [shape = 'u32[]', space=smem, size = 0x4, offset = 0x4, fixed_abs, tag = 'smem constant byte address 0x4 - core index']
  #allocation1 [shape = 'u32[144,128]{1,0:T(1,128)}', space=vmem, size = 0x12000, scoped, tag = 'internal scratch']
  %s0 = inlined_call_operand.vmem [shape: bf16[16,32], index: 0, kind: input, shape index: {}]
  %s1 = inlined_call_operand.vmem [shape: bf16[32,20], index: 1, kind: input, shape index: {}]
  %s2 = inlined_call_operand.vmem [shape: bf16[20,80], index: 2, kind: input, shape index: {}]
  %s3 = inlined_call_operand.vmem [shape: f32[1,80], index: 3, kind: input, shape index: {}]
  %s4 = inlined_call_operand.vmem [shape: bf16[80,16], index: 4, kind: input, shape index: {}]
  %s5 = inlined_call_operand.vmem [shape: f32[1,16], index: 5, kind: input, shape index: {}]
  %s6 = inlined_call_operand.vmem [shape: bf16[16,64], index: 6, kind: input, shape index: {}]
  %s7 = inlined_call_operand.hbm [shape: f32[16,64], index: 7, kind: output, shape index: {}]
  %s8 = sld [smem:[#allocation0]]
  $region38: #{tpu_custom_call.1} parent=0
    _
  %s10 = ssub.s32 1, %s8
  %s11 = scalar_select 0, %s10, %s8
  $region1: #{tpu_custom_call.1} parent=0
    #allocation2 [shape = 'u8[8192]{0}', space=vmem, size = 0x2000, scoped, tag = 'output window, operand 0, single buffered']
    #allocation3 [shape = 's32[1]{0}', space=sflag, size = 0x4, scoped, tag = 'scoped memory for tpu_custom_call.1']
    %12 = vsyncpa [#allocation3], 0
    // Predicated region
    $region2: #{tpu_custom_call.1} parent=1 // pred_check
      _
    $region3: #{tpu_custom_call.1} parent=1 // pred_check_branch
      %14 = sbr.rel (0) target = $region5
    $region4: #{tpu_custom_call.1} parent=1 // pred_region
      _
    $region5: #{tpu_custom_call.1} parent=1 // pred_fallthru
      _
    // Predicated region
    $region6: #{tpu_custom_call.1} parent=1 // pred_check
      _
    $region7: #{tpu_custom_call.1} parent=1 // pred_check_branch
      %16 = sbr.rel (0) target = $region9
    $region8: #{tpu_custom_call.1} parent=1 // pred_region
      _
    $region9: #{tpu_custom_call.1} parent=1 // pred_fallthru
      _
    // Predicated region
    $region10: #{tpu_custom_call.1} parent=1 // pred_check
      _
    $region11: #{tpu_custom_call.1} parent=1 // pred_check_branch
      %18 = sbr.rel (0) target = $region13
    $region12: #{tpu_custom_call.1} parent=1 // pred_region
      _
    $region13: #{tpu_custom_call.1} parent=1 // pred_fallthru
      _
    // Predicated region
    $region14: #{tpu_custom_call.1} parent=1 // pred_check
      _
    $region15: #{tpu_custom_call.1} parent=1 // pred_check_branch
      %20 = sbr.rel (0) target = $region17
    $region16: #{tpu_custom_call.1} parent=1 // pred_region
      _
    $region17: #{tpu_custom_call.1} parent=1 // pred_fallthru
      _
    // Predicated region
    $region18: #{tpu_custom_call.1} parent=1 // pred_check
      _
    $region19: #{tpu_custom_call.1} parent=1 // pred_check_branch
      %22 = sbr.rel (0) target = $region21
    $region20: #{tpu_custom_call.1} parent=1 // pred_region
      _
    $region21: #{tpu_custom_call.1} parent=1 // pred_fallthru
      _
    // Predicated region
    $region22: #{tpu_custom_call.1} parent=1 // pred_check
      _
    $region23: #{tpu_custom_call.1} parent=1 // pred_check_branch
      %24 = sbr.rel (0) target = $region25
    $region24: #{tpu_custom_call.1} parent=1 // pred_region
      _
    $region25: #{tpu_custom_call.1} parent=1 // pred_fallthru
      _
    // Predicated region
    $region26: #{tpu_custom_call.1} parent=1 // pred_check
      _
    $region27: #{tpu_custom_call.1} parent=1 // pred_check_branch
      %26 = sbr.rel (0) target = $region29
    $region28: #{tpu_custom_call.1} parent=1 // pred_region
      _
    $region29: #{tpu_custom_call.1} parent=1 // pred_fallthru
      _
    %v28 = vld [vmem:[%s0] sm:$0xf]
    %v29 = vld [vmem:[%s0 + $0x4] sm:$0xf]
    %v30 = vld [vmem:[%s1] sm:$0xf]
    %v31 = vld [vmem:[%s1 + $0x4] sm:$0xf]
    %v32 = vld [vmem:[%s1 + $0x8] sm:$0xf]
    %v33 = vld [vmem:[%s1 + $0xc] sm:$0xf]
    %v36 = vunpack.c.l.b16 %v28
    %v37 = vunpack.c.l.b16 %v29
    %v38 = vpack.c.b16 %v37, %v36
    %v43 = vunpack.c.l.b16 %v30
    %v44 = vunpack.c.l.b16 %v31
    %v45 = vunpack.c.l.b16 %v32
    %v46 = vunpack.c.l.b16 %v33
    %v47 = vpack.c.b16 %v44, %v43
    %v48 = vpack.c.b16 %v46, %v45
    %vm51 = vcmask 261120
    %v53 = vsel %vm51, %v38, 0
    %55 = vmatprep.subr.bf16.mxu0 0
    %56 = vmatpush1.bf16.msra.mxu0 0
    %57 = vmatprep.subr.bf16.mxu0 0
    %58 = vmatpush1.bf16.msra.mxu0 0
    %59 = vmatprep.subr.bf16.mxu0 0
    %60 = vmatpush1.bf16.msra.mxu0 0
    %61 = vmatprep.subr.bf16.mxu0 0
    %62 = vmatpush1.bf16.msra.mxu0 0
    %63 = vmatprep.subr.bf16.mxu0 0
    %64 = vmatpush1.bf16.msra.mxu0 0
    %65 = vmatprep.subr.bf16.mxu0 0
    %66 = vmatpush1.bf16.msra.mxu0 0
    %67 = vmatprep.subr.bf16.mxu0 0
    %68 = vmatpush1.bf16.msra.mxu0 %v48
    %69 = vmatprep.subr.bf16.mxu0 0
    %70 = vmatpush1.bf16.msra.mxu0 %v47
    %71 = vmatprep.subr.bf16.mxu0 0
    %72 = vmatpush2.bf16.msra.mxu0 0
    %73 = vmatprep.subr.bf16.mxu0 0
    %74 = vmatpush2.bf16.msra.mxu0 0
    %75 = vmatprep.subr.bf16.mxu0 0
    %76 = vmatpush2.bf16.msra.mxu0 0
    %77 = vmatprep.subr.bf16.mxu0 0
    %78 = vmatpush2.bf16.msra.mxu0 0
    %79 = vmatprep.subr.bf16.mxu0 0
    %80 = vmatpush2.bf16.msra.mxu0 0
    %81 = vmatprep.subr.bf16.mxu0 0
    %82 = vmatpush2.bf16.msra.mxu0 0
    %83 = vmatprep.subr.bf16.mxu0 0
    %84 = vmatpush2.bf16.msra.mxu0 0
    %85 = vmatprep.subr.bf16.mxu0 0
    %86 = vmatpush2.bf16.msra.mxu0 0
    %87 = vmatprep.mubr.bf16.mxu0 0
    %88 = vmatmul.mubr.bf16.gmra.mxu0 %v53
    %v89 = vpop.f32.mrf.mxu0
    %v90 = vadd.f32 0.0, %v89
    %v91 = vpop.f32.mrf.mxu0
    %v92 = vpop.f32.mrf.mxu0
    %v93 = vadd.f32 0.0, %v92
    %v94 = vpop.f32.mrf.mxu0
    %95 = vdwg.mxu0
    %v96 = vmax.f32 %v90, 0.0
    %v97 = vmax.f32 %v93, 0.0
    %v98 = vpack.c.bf16 %v97, %v96
    %v99 = vld [vmem:[%s2] sm:$0xf]
    %v100 = vld [vmem:[%s2 + $0x4] sm:$0xf]
    %v101 = vld [vmem:[%s2 + $0x8] sm:$0x3]
    %v102 = vld [vmem:[%s3] sm:$0x1]
    %v104 = vlaneseq
    %v105 = vshrl.u32 %v104, 7
    %v106 = vsub.s32 0, %v105
    %v107 = vrot.slane %v102, %v106
    %v112 = vunpack.c.l.b16 %v99
    %v113 = vunpack.c.l.b16 %v100
    %v114 = vunpack.c.l.b16 %v101
    %v115 = vpack.c.b16 %v113, %v112
    %v116 = vpack.c.b16 %v114, %v114
    %vm118 = vcmask 162816
    %v120 = vsel %vm118, %v98, 0
    %vm122 = vcmask 1041408
    %v124 = vsel %vm122, %v116, 0
    %126 = vmatprep.subr.bf16.mxu0 0
    %127 = vmatpush1.bf16.msra.mxu0 0
    %128 = vmatprep.subr.bf16.mxu0 0
    %129 = vmatpush1.bf16.msra.mxu0 0
    %130 = vmatprep.subr.bf16.mxu0 0
    %131 = vmatpush1.bf16.msra.mxu0 0
    %132 = vmatprep.subr.bf16.mxu0 0
    %133 = vmatpush1.bf16.msra.mxu0 0
    %134 = vmatprep.subr.bf16.mxu0 0
    %135 = vmatpush1.bf16.msra.mxu0 0
    %136 = vmatprep.subr.bf16.mxu0 0
    %137 = vmatpush1.bf16.msra.mxu0 0
    %138 = vmatprep.subr.bf16.mxu0 0
    %139 = vmatpush1.bf16.msra.mxu0 %v124
    %140 = vmatprep.subr.bf16.mxu0 0
    %141 = vmatpush1.bf16.msra.mxu0 %v115
    %142 = vmatprep.subr.bf16.mxu0 0
    %143 = vmatpush2.bf16.msra.mxu0 0
    %144 = vmatprep.subr.bf16.mxu0 0
    %145 = vmatpush2.bf16.msra.mxu0 0
    %146 = vmatprep.subr.bf16.mxu0 0
    %147 = vmatpush2.bf16.msra.mxu0 0
    %148 = vmatprep.subr.bf16.mxu0 0
    %149 = vmatpush2.bf16.msra.mxu0 0
    %150 = vmatprep.subr.bf16.mxu0 0
    %151 = vmatpush2.bf16.msra.mxu0 0
    %152 = vmatprep.subr.bf16.mxu0 0
    %153 = vmatpush2.bf16.msra.mxu0 0
    %154 = vmatprep.subr.bf16.mxu0 0
    %155 = vmatpush2.bf16.msra.mxu0 0
    %156 = vmatprep.subr.bf16.mxu0 0
    %157 = vmatpush2.bf16.msra.mxu0 0
    %158 = vmatprep.mubr.bf16.mxu0 0
    %159 = vmatmul.mubr.bf16.gmra.mxu0 %v120
    %v160 = vpop.f32.mrf.mxu0
    %v161 = vadd.f32 %v107, %v160
    %v162 = vpop.f32.mrf.mxu0
    %v163 = vpop.f32.mrf.mxu0
    %v164 = vadd.f32 %v107, %v163
    %v165 = vpop.f32.mrf.mxu0
    %166 = vdwg.mxu0
    %v167 = vmax.f32 %v161, 0.0
    %v168 = vmax.f32 %v164, 0.0
    %v169 = vpack.c.bf16 %v168, %v167
    %v170 = vld [vmem:[%s4] sm:$0xf]
    %v171 = vld [vmem:[%s4 + $0x4] sm:$0xf]
    %v172 = vld [vmem:[%s4 + $0x8] sm:$0xf]
    %v173 = vld [vmem:[%s4 + $0xc] sm:$0xf]
    %v174 = vld [vmem:[%s4 + $0x10] sm:$0xf]
    %v175 = vld [vmem:[%s4 + $0x14] sm:$0xf]
    %v176 = vld [vmem:[%s4 + $0x18] sm:$0xf]
    %v177 = vld [vmem:[%s4 + $0x1c] sm:$0xf]
    %v178 = vld [vmem:[%s4 + $0x20] sm:$0xf]
    %v179 = vld [vmem:[%s4 + $0x24] sm:$0xf]
    %v180 = vld [vmem:[%s5] sm:$0x1]
    %v182 = vlaneseq
    %v183 = vshrl.u32 %v182, 7
    %v184 = vsub.s32 0, %v183
    %v185 = vrot.slane %v180, %v184
    %v197 = vunpack.c.l.b16 %v170
    %v198 = vunpack.c.l.b16 %v171
    %v199 = vunpack.c.l.b16 %v172
    %v200 = vunpack.c.l.b16 %v173
    %v201 = vunpack.c.l.b16 %v174
    %v202 = vunpack.c.l.b16 %v175
    %v203 = vunpack.c.l.b16 %v176
    %v204 = vunpack.c.l.b16 %v177
    %v205 = vunpack.c.l.b16 %v178
    %v206 = vunpack.c.l.b16 %v179
    %v207 = vpack.c.b16 %v198, %v197
    %v208 = vpack.c.b16 %v200, %v199
    %v209 = vpack.c.b16 %v202, %v201
    %v210 = vpack.c.b16 %v204, %v203
    %v211 = vpack.c.b16 %v206, %v205
    %vm217 = vcmask 654336
    %v219 = vsel %vm217, %v169, 0
    %221 = vmatprep.subr.bf16.mxu0 0
    %222 = vmatpush1.bf16.msra.mxu0 0
    %223 = vmatprep.subr.bf16.mxu0 0
    %224 = vmatpush1.bf16.msra.mxu0 0
    %225 = vmatprep.subr.bf16.mxu0 0
    %226 = vmatpush1.bf16.msra.mxu0 0
    %227 = vmatprep.subr.bf16.mxu0 0
    %228 = vmatpush1.bf16.msra.mxu0 %v211
    %229 = vmatprep.subr.bf16.mxu0 0
    %230 = vmatpush1.bf16.msra.mxu0 %v210
    %231 = vmatprep.subr.bf16.mxu0 0
    %232 = vmatpush1.bf16.msra.mxu0 %v209
    %233 = vmatprep.subr.bf16.mxu0 0
    %234 = vmatpush1.bf16.msra.mxu0 %v208
    %235 = vmatprep.subr.bf16.mxu0 0
    %236 = vmatpush1.bf16.msra.mxu0 %v207
    %237 = vmatprep.subr.bf16.mxu0 0
    %238 = vmatpush2.bf16.msra.mxu0 0
    %239 = vmatprep.subr.bf16.mxu0 0
    %240 = vmatpush2.bf16.msra.mxu0 0
    %241 = vmatprep.subr.bf16.mxu0 0
    %242 = vmatpush2.bf16.msra.mxu0 0
    %243 = vmatprep.subr.bf16.mxu0 0
    %244 = vmatpush2.bf16.msra.mxu0 0
    %245 = vmatprep.subr.bf16.mxu0 0
    %246 = vmatpush2.bf16.msra.mxu0 0
    %247 = vmatprep.subr.bf16.mxu0 0
    %248 = vmatpush2.bf16.msra.mxu0 0
    %249 = vmatprep.subr.bf16.mxu0 0
    %250 = vmatpush2.bf16.msra.mxu0 0
    %251 = vmatprep.subr.bf16.mxu0 0
    %252 = vmatpush2.bf16.msra.mxu0 0
    %253 = vmatprep.mubr.bf16.mxu0 0
    %254 = vmatmul.mubr.bf16.gmra.mxu0 %v219
    %v255 = vpop.f32.mrf.mxu0
    %v256 = vadd.f32 %v185, %v255
    %v257 = vpop.f32.mrf.mxu0
    %v258 = vpop.f32.mrf.mxu0
    %v259 = vadd.f32 %v185, %v258
    %v260 = vpop.f32.mrf.mxu0
    %261 = vdwg.mxu0
    %v262 = vmax.f32 %v256, 0.0
    %v263 = vmax.f32 %v259, 0.0
    %v264 = vpack.c.bf16 %v263, %v262
    %v265 = vld [vmem:[%s6] sm:$0xf]
    %v266 = vld [vmem:[%s6 + $0x4] sm:$0xf]
    %v269 = vunpack.c.l.b16 %v265
    %v270 = vunpack.c.l.b16 %v266
    %v271 = vpack.c.b16 %v270, %v269
    %vm273 = vcmask 130048
    %v275 = vsel %vm273, %v264, 0
    %277 = vmatprep.subr.bf16.mxu0 0
    %278 = vmatpush1.bf16.msra.mxu0 0
    %279 = vmatprep.subr.bf16.mxu0 0
    %280 = vmatpush1.bf16.msra.mxu0 0
    %281 = vmatprep.subr.bf16.mxu0 0
    %282 = vmatpush1.bf16.msra.mxu0 0
    %283 = vmatprep.subr.bf16.mxu0 0
    %284 = vmatpush1.bf16.msra.mxu0 0
    %285 = vmatprep.subr.bf16.mxu0 0
    %286 = vmatpush1.bf16.msra.mxu0 0
    %287 = vmatprep.subr.bf16.mxu0 0
    %288 = vmatpush1.bf16.msra.mxu0 0
    %289 = vmatprep.subr.bf16.mxu0 0
    %290 = vmatpush1.bf16.msra.mxu0 0
    %291 = vmatprep.subr.bf16.mxu0 0
    %292 = vmatpush1.bf16.msra.mxu0 %v271
    %293 = vmatprep.subr.bf16.mxu0 0
    %294 = vmatpush2.bf16.msra.mxu0 0
    %295 = vmatprep.subr.bf16.mxu0 0
    %296 = vmatpush2.bf16.msra.mxu0 0
    %297 = vmatprep.subr.bf16.mxu0 0
    %298 = vmatpush2.bf16.msra.mxu0 0
    %299 = vmatprep.subr.bf16.mxu0 0
    %300 = vmatpush2.bf16.msra.mxu0 0
    %301 = vmatprep.subr.bf16.mxu0 0
    %302 = vmatpush2.bf16.msra.mxu0 0
    %303 = vmatprep.subr.bf16.mxu0 0
    %304 = vmatpush2.bf16.msra.mxu0 0
    %305 = vmatprep.subr.bf16.mxu0 0
    %306 = vmatpush2.bf16.msra.mxu0 0
    %307 = vmatprep.subr.bf16.mxu0 0
    %308 = vmatpush2.bf16.msra.mxu0 0
    %309 = vmatprep.mubr.bf16.mxu0 0
    %310 = vmatmul.mubr.bf16.gmra.mxu0 %v275
    %v311 = vpop.f32.mrf.mxu0
    %v312 = vadd.f32 0.0, %v311
    %v313 = vpop.f32.mrf.mxu0
    %v314 = vpop.f32.mrf.mxu0
    %v315 = vadd.f32 0.0, %v314
    %v316 = vpop.f32.mrf.mxu0
    %317 = vdwg.mxu0
    %vm318 = vcmask 523264
    %319 = vst.msk [vmem:[#allocation2] sm:$0xff] %vm318, %v312
    %320 = vst.msk [vmem:[#allocation2 + $0x8] sm:$0xff] %vm318, %v315
    // Predicated region
    $region30: #{tpu_custom_call.1} parent=1 // pred_check
      _
    $region31: #{tpu_custom_call.1} parent=1 // pred_check_branch
      %322 = sbr.rel (0) target = $region33
    $region32: #{tpu_custom_call.1} parent=1 // pred_region
      %s324 = ssub.s32 256, 256
      %325 = vsyncadd [#allocation3], %s324
      %s326 = sshll.u32 [#allocation2], 4
      %s327 = int_to_ptr.vmem [resolvable:$true] %s326
      %332 = dma.vmem_to_hbm [thread:$0]  %s327, 256, %s7, [#allocation3], 128, 128, 8
    $region33: #{tpu_custom_call.1} parent=1 // pred_fallthru
      _
    // Predicated region
    $region34: #{tpu_custom_call.1} parent=1 // pred_check
      _
    $region35: #{tpu_custom_call.1} parent=1 // pred_check_branch
      %334 = sbr.rel (0) target = $region37
    $region36: #{tpu_custom_call.1} parent=1 // pred_region
      %335 = dma.done [#allocation3], 256
    $region37: #{tpu_custom_call.1} parent=1 // pred_fallthru
      _
    %336 = vsyncpa [#allocation3], 1

</llo_original>
